<compile_context>
chip_gen: v7x
topology: tpu7x:2x2x1
jax: 0.10.0
libtpu: 0.0.40
codegen_flags: <defaults>
</compile_context>

<pallas_src>
import functools

import jax
import jax.numpy as jnp
from jax.experimental import pallas as pl
from jax.experimental.pallas import tpu as pltpu


def _round_up(x, m):
    return (x + m - 1) // m * m


def _cdiv(a, b):
    return (a + b - 1) // b


def _vmem_budget_bytes():
    """Usable scoped-VMEM budget, generation aware (v7x 64 MiB/TC, else 128)."""
    cap = None
    try:
        cap = getattr(pltpu.get_tpu_info(), "vmem_capacity_bytes", None)
    except Exception:
        cap = None
    if not cap:
        cap = 64 * 1024 * 1024          # conservative default (v7x per-TC)
    return int(cap) * 3 // 4            # leave headroom for compiler scratch


def _pick_tile_rows(m, k_pad, c_pad, vmem_budget, single_buffer_w):
    """Largest M tile that fits the VMEM budget, with >= 2 grid tiles."""
    w_bufs = 1 if single_buffer_w else 2
    fixed = w_bufs * k_pad * c_pad * 2            # bf16 weights
    fixed += 2 * 2 * 8 * c_pad * 4                # psum/psq f32, double-buffered
    per_row = 2 * (k_pad + c_pad) * 2             # bf16 patch + y rows, 2 buffers
    tm = (vmem_budget - fixed) // max(per_row, 1)
    tm = min(1024, tm)
    tm = (tm // 16) * 16                          # bf16 sublane packing
    tm = max(16, tm)
    # Guarantee at least 2 grid tiles so both v7x TensorCores get work.
    tm = min(tm, max(16, _round_up(_cdiv(m, 2), 16)))
    m_pad = _round_up(m, tm)
    return tm, m_pad


# ----------------------------------------------------------------------------
# Kernel: conv-as-matmul (bf16 patches @ bf16 W, f32 accumulation) fused with
#         per-tile partial sum / sum-of-squares for the BatchNorm statistics.
#         The grid axis is fully parallel (no resident accumulator).
# ----------------------------------------------------------------------------
def conv_mm_stats_kernel(p_ref, w_ref, y_ref, psum_ref, psq_ref):
    y = jnp.dot(p_ref[...], w_ref[...], preferred_element_type=jnp.float32)
    y_ref[...] = y.astype(y_ref.dtype)            # bf16 writeback (half traffic)

    # BN partial sums in f32: fold rows into 8 sublane groups so the stored
    # (8, C) block is fully meaningful; the wrapper sums the rows.
    tm, c = y.shape
    y3 = y.reshape(tm // 8, 8, c)
    psum_ref[...] = jnp.sum(y3, axis=0)
    psq_ref[...] = jnp.sum(y3 * y3, axis=0)


# ----------------------------------------------------------------------------
# Glue: im2col patch extraction (3x3, stride 2, pad 1), bf16.
# ----------------------------------------------------------------------------
def extract_patches(x_nchw):
    """x: (N, Cin, H, W) -> patches (N*Ho*Wo, 9*Cin), row-major (ky,kx,cin)."""
    n, cin, h, w = x_nchw.shape
    ho, wo = (h + 2 - 3) // 2 + 1, (w + 2 - 3) // 2 + 1
    x = jnp.transpose(x_nchw, (0, 2, 3, 1))                  # NHWC
    x = jnp.pad(x, ((0, 0), (1, 1), (1, 1), (0, 0)))
    taps = []
    for ky in range(3):
        for kx in range(3):
            taps.append(x[:, ky:ky + 2 * ho:2, kx:kx + 2 * wo:2, :])
    p = jnp.stack(taps, axis=3)                               # (N,Ho,Wo,9,Cin)
    return p.reshape(n * ho * wo, 9 * cin), (n, ho, wo)


@functools.partial(jax.jit, static_argnames=("eps", "single_buffer_w"))
def _down_forward_impl(x_nchw, conv_w, gamma, beta, *, eps, single_buffer_w):
    cout = conv_w.shape[0]

    patches, (n, ho, wo) = extract_patches(x_nchw.astype(jnp.bfloat16))
    m, k = patches.shape

    # Alignment: lane-dense Cout (128), bf16-aligned K (16), VMEM-budgeted M.
    c_pad = _round_up(cout, 128)
    k_pad = _round_up(k, 16)
    budget = _vmem_budget_bytes()
    tm, m_pad = _pick_tile_rows(m, k_pad, c_pad, budget, single_buffer_w)
    ntiles = m_pad // tm

    patches = jnp.pad(patches, ((0, m_pad - m), (0, k_pad - k)))
    # (Cout, Cin, 3, 3) -> (K = ky,kx,cin ; Cout), matching the patch order.
    w_mat = jnp.transpose(conv_w, (2, 3, 1, 0)).reshape(k, cout)
    w_mat = jnp.pad(w_mat.astype(jnp.bfloat16),
                    ((0, k_pad - k), (0, c_pad - cout)))

    if single_buffer_w:
        # Grid-invariant weights: one VMEM buffer, never refilled.
        w_spec = pl.BlockSpec((k_pad, c_pad), lambda i: (0, 0),
                              pipeline_mode=pl.Buffered(1))
    else:
        w_spec = pl.BlockSpec((k_pad, c_pad), lambda i: (0, 0))

    flops = 2 * m_pad * k_pad * c_pad
    bytes_accessed = (2 * (m_pad * k_pad + k_pad * c_pad + m_pad * c_pad)
                      + 4 * 2 * ntiles * 8 * c_pad)

    y, psum, psq = pl.pallas_call(
        conv_mm_stats_kernel,
        out_shape=(
            jax.ShapeDtypeStruct((m_pad, c_pad), jnp.bfloat16),
            jax.ShapeDtypeStruct((ntiles * 8, c_pad), jnp.float32),
            jax.ShapeDtypeStruct((ntiles * 8, c_pad), jnp.float32),
        ),
        grid_spec=pltpu.PrefetchScalarGridSpec(
            num_scalar_prefetch=0,
            grid=(ntiles,),
            in_specs=[
                pl.BlockSpec((tm, k_pad), lambda i: (i, 0)),
                w_spec,
            ],
            out_specs=(
                pl.BlockSpec((tm, c_pad), lambda i: (i, 0)),
                pl.BlockSpec((8, c_pad), lambda i: (i, 0)),
                pl.BlockSpec((8, c_pad), lambda i: (i, 0)),
            ),
        ),
        compiler_params=pltpu.CompilerParams(
            dimension_semantics=("parallel",),
            vmem_limit_bytes=budget),
        cost_estimate=pl.CostEstimate(
            flops=flops, transcendentals=0, bytes_accessed=bytes_accessed),
    )(patches, w_mat)

    # Batch statistics over the true M = N*Ho*Wo rows (padded rows are zero).
    # Partial sums stay f32; single-pass E[y^2]-E[y]^2.
    # TODO(synk): switch to a Welford/two-pass variant if activations carry
    # large per-channel offsets (cancellation risk).
    s = jnp.sum(psum, axis=0)[:cout]
    sq = jnp.sum(psq, axis=0)[:cout]
    mean = s / m
    var = sq / m - mean * mean                    # biased variance (torch BN fwd)
    inv = gamma.astype(jnp.float32) * jax.lax.rsqrt(var + eps)
    scale = inv.reshape(1, cout)
    shift = (beta.astype(jnp.float32) - mean * inv).reshape(1, cout)

    # BN scale/shift + ReLU + crop + NHWC->NCHW as ONE fused XLA epilogue:
    # single read of bf16 y, single write of the final f32 output.
    o = jnp.maximum(y[:m, :cout].astype(jnp.float32) * scale + shift, 0.0)
    o = o.reshape(n, ho, wo, cout)
    return jnp.transpose(o, (0, 3, 1, 2))


def down_forward(x_nchw, conv_w, conv_b, gamma, beta, eps=1e-5):
    """Conv2d(3x3, stride 2, pad 1) + BatchNorm2d (batch stats) + ReLU.

    conv_b is accepted for API parity but cancels exactly under training-mode
    BatchNorm, so it is not applied in the kernel path.
    """
    del conv_b
    try:
        out = _down_forward_impl(x_nchw, conv_w, gamma, beta,
                                 eps=eps, single_buffer_w=True)
        return jax.block_until_ready(out)
    except Exception:
        # Fallback for builds that reject single-buffered (Buffered(1)) specs.
        out = _down_forward_impl(x_nchw, conv_w, gamma, beta,
                                 eps=eps, single_buffer_w=False)
        return jax.block_until_ready(out)


# ----------------------------------------------------------------------------
# Pure-JAX reference (for correctness check).  Includes the conv bias, which
# the kernel path drops because it cancels under training-mode BatchNorm.
# ----------------------------------------------------------------------------
def down_reference(x, conv_w, conv_b, gamma, beta, eps=1e-5):
    y = jax.lax.conv_general_dilated(
        x, conv_w, window_strides=(2, 2), padding=((1, 1), (1, 1)),
        dimension_numbers=("NCHW", "OIHW", "NCHW"))
    y = y + conv_b.reshape(1, -1, 1, 1)
    mean = jnp.mean(y, axis=(0, 2, 3), keepdims=True)
    var = jnp.mean((y - mean) ** 2, axis=(0, 2, 3), keepdims=True)
    y = (y - mean) / jnp.sqrt(var + eps)
    y = y * gamma.reshape(1, -1, 1, 1) + beta.reshape(1, -1, 1, 1)
    return jnp.maximum(y, 0.0)


if __name__ == "__main__":
    N, CIN, COUT, H, W = 2, 4, 8, 16, 16

    key = jax.random.PRNGKey(0)
    kx, kw, kb, kg, kbt = jax.random.split(key, 5)
    x = jax.random.normal(kx, (N, CIN, H, W), dtype=jnp.float32)
    conv_w = 0.1 * jax.random.normal(kw, (COUT, CIN, 3, 3), dtype=jnp.float32)
    conv_b = 0.05 * jax.random.normal(kb, (COUT,), dtype=jnp.float32)  # use_bias
    gamma = 1.0 + 0.1 * jax.random.normal(kg, (COUT,), dtype=jnp.float32)
    beta = 0.1 * jax.random.normal(kbt, (COUT,), dtype=jnp.float32)

    out = jax.block_until_ready(down_forward(x, conv_w, conv_b, gamma, beta))
    ref = down_reference(x, conv_w, conv_b, gamma, beta)

    assert out.shape == (N, COUT, H // 2, W // 2), out.shape
    # bf16 MXU inputs / bf16 y intermediate -> relaxed tolerance vs f32 ref.
    assert jnp.allclose(out, ref, atol=7.5e-2, rtol=5e-2), \
        float(jnp.max(jnp.abs(out - ref)))
    print("KERNEL_OK")
</pallas_src>

<mosaic_0001>
module attributes {stable_mosaic.version = 11 : i64} {
  func.func @conv_mm_stats_kernel(%arg0: i32, %arg1: memref<64x48xbf16, #tpu.memory_space<vmem>>, %arg2: memref<48x128xbf16, #tpu.memory_space<vmem>>, %arg3: memref<64x128xbf16, #tpu.memory_space<vmem>>, %arg4: memref<8x128xf32, #tpu.memory_space<vmem>>, %arg5: memref<8x128xf32, #tpu.memory_space<vmem>>) attributes {dimension_semantics = [#tpu.dimension_semantics<parallel>], iteration_bounds = array<i64: 2>, scalar_prefetch = 0 : i64, scratch_operands = 0 : i64, tpu.core_type = #tpu.core_type<tc>, window_params = [{transform_indices = @transform_0, window_bounds = array<i64: 64, 48>}, {pipeline_mode = #tpu.pipeline_mode<synchronous>, transform_indices = @transform_1, window_bounds = array<i64: 48, 128>}, {transform_indices = @transform_2, window_bounds = array<i64: 64, 128>}, {transform_indices = @transform_3, window_bounds = array<i64: 8, 128>}, {transform_indices = @transform_4, window_bounds = array<i64: 8, 128>}]} {
    %c0 = arith.constant 0 : index
    %c0_0 = arith.constant 0 : index
    %0 = vector.load %arg1[%c0, %c0_0] : memref<64x48xbf16, #tpu.memory_space<vmem>>, vector<64x48xbf16>
    %c0_1 = arith.constant 0 : index
    %c0_2 = arith.constant 0 : index
    %1 = vector.load %arg2[%c0_1, %c0_2] : memref<48x128xbf16, #tpu.memory_space<vmem>>, vector<48x128xbf16>
    %cst = arith.constant dense<0.000000e+00> : vector<64x128xf32>
    %2 = tpu.matmul %0, %1, %cst {dimension_numbers = #tpu.dot_dimension_numbers<[1], [0], [0], [1], [0, 0, 1, 1], [], []>} : vector<64x48xbf16>, vector<48x128xbf16>, vector<64x128xf32> -> vector<64x128xf32>
    %3 = arith.truncf %2 : vector<64x128xf32> to vector<64x128xbf16>
    %c0_3 = arith.constant 0 : index
    %c0_4 = arith.constant 0 : index
    %4 = vector.load %arg3[%c0_3, %c0_4] : memref<64x128xbf16, #tpu.memory_space<vmem>>, vector<64x128xbf16>
    tpu.vector_store %arg3[%c0_3, %c0_4], %3 {strides = array<i32>} : memref<64x128xbf16, #tpu.memory_space<vmem>>, vector<64x128xbf16>,
    %5 = vector.shape_cast %2 : vector<64x128xf32> to vector<8x8x128xf32>
    %cst_5 = arith.constant dense<0.000000e+00> : vector<8x128xf32>
    %6 = vector.multi_reduction <add>, %5, %cst_5 [0] : vector<8x8x128xf32> to vector<8x128xf32>
    %c0_6 = arith.constant 0 : index
    %c0_7 = arith.constant 0 : index
    %7 = vector.load %arg4[%c0_6, %c0_7] : memref<8x128xf32, #tpu.memory_space<vmem>>, vector<8x128xf32>
    tpu.vector_store %arg4[%c0_6, %c0_7], %6 {strides = array<i32>} : memref<8x128xf32, #tpu.memory_space<vmem>>, vector<8x128xf32>,
    %8 = arith.mulf %5, %5 : vector<8x8x128xf32>
    %cst_8 = arith.constant dense<0.000000e+00> : vector<8x128xf32>
    %9 = vector.multi_reduction <add>, %8, %cst_8 [0] : vector<8x8x128xf32> to vector<8x128xf32>
    %c0_9 = arith.constant 0 : index
    %c0_10 = arith.constant 0 : index
    %10 = vector.load %arg5[%c0_9, %c0_10] : memref<8x128xf32, #tpu.memory_space<vmem>>, vector<8x128xf32>
    tpu.vector_store %arg5[%c0_9, %c0_10], %9 {strides = array<i32>} : memref<8x128xf32, #tpu.memory_space<vmem>>, vector<8x128xf32>,
    return
  }
  func.func @transform_0(%arg0: i32) -> (i32, i32) {
    %c0_i32 = arith.constant 0 : i32
    %c0_i32_0 = arith.constant 0 : i32
    return %arg0, %c0_i32 : i32, i32
  }
  func.func @transform_1(%arg0: i32) -> (i32, i32) {
    %c0_i32 = arith.constant 0 : i32
    %c0_i32_0 = arith.constant 0 : i32
    %c0_i32_1 = arith.constant 0 : i32
    return %c0_i32, %c0_i32_0 : i32, i32
  }
  func.func @transform_2(%arg0: i32) -> (i32, i32) {
    %c0_i32 = arith.constant 0 : i32
    %c0_i32_0 = arith.constant 0 : i32
    return %arg0, %c0_i32 : i32, i32
  }
  func.func @transform_3(%arg0: i32) -> (i32, i32) {
    %c0_i32 = arith.constant 0 : i32
    %c0_i32_0 = arith.constant 0 : i32
    return %arg0, %c0_i32 : i32, i32
  }
  func.func @transform_4(%arg0: i32) -> (i32, i32) {
    %c0_i32 = arith.constant 0 : i32
    %c0_i32_0 = arith.constant 0 : i32
    return %arg0, %c0_i32 : i32, i32
  }
}

module attributes {stable_mosaic.version = 11 : i64} {
  func.func @conv_mm_stats_kernel(%arg0: i32, %arg1: memref<64x48xbf16, #tpu.memory_space<vmem>>, %arg2: memref<48x128xbf16, #tpu.memory_space<vmem>>, %arg3: memref<64x128xbf16, #tpu.memory_space<vmem>>, %arg4: memref<8x128xf32, #tpu.memory_space<vmem>>, %arg5: memref<8x128xf32, #tpu.memory_space<vmem>>) attributes {dimension_semantics = [#tpu.dimension_semantics<parallel>], iteration_bounds = array<i64: 2>, scalar_prefetch = 0 : i64, scratch_operands = 0 : i64, tpu.core_type = #tpu.core_type<tc>, window_params = [{transform_indices = @transform_0, window_bounds = array<i64: 64, 48>}, {pipeline_mode = #tpu.pipeline_mode<synchronous>, transform_indices = @transform_1, window_bounds = array<i64: 48, 128>}, {transform_indices = @transform_2, window_bounds = array<i64: 64, 128>}, {transform_indices = @transform_3, window_bounds = array<i64: 8, 128>}, {transform_indices = @transform_4, window_bounds = array<i64: 8, 128>}]} {
    %c0 = arith.constant 0 : index
    %c0_0 = arith.constant 0 : index
    %0 = vector.load %arg1[%c0, %c0_0] : memref<64x48xbf16, #tpu.memory_space<vmem>>, vector<64x48xbf16>
    %c0_1 = arith.constant 0 : index
    %c0_2 = arith.constant 0 : index
    %1 = vector.load %arg2[%c0_1, %c0_2] : memref<48x128xbf16, #tpu.memory_space<vmem>>, vector<48x128xbf16>
    %cst = arith.constant dense<0.000000e+00> : vector<64x128xf32>
    %2 = tpu.matmul %0, %1, %cst {dimension_numbers = #tpu.dot_dimension_numbers<[1], [0], [0], [1], [0, 0, 1, 1], [], []>} : vector<64x48xbf16>, vector<48x128xbf16>, vector<64x128xf32> -> vector<64x128xf32>
    %3 = arith.truncf %2 : vector<64x128xf32> to vector<64x128xbf16>
    %c0_3 = arith.constant 0 : index
    %c0_4 = arith.constant 0 : index
    %4 = vector.load %arg3[%c0_3, %c0_4] : memref<64x128xbf16, #tpu.memory_space<vmem>>, vector<64x128xbf16>
    tpu.vector_store %arg3[%c0_3, %c0_4], %3 {strides = array<i32>} : memref<64x128xbf16, #tpu.memory_space<vmem>>, vector<64x128xbf16>,
    %5 = vector.shape_cast %2 : vector<64x128xf32> to vector<8x8x128xf32>
    %cst_5 = arith.constant dense<0.000000e+00> : vector<8x128xf32>
    %6 = vector.multi_reduction <add>, %5, %cst_5 [0] : vector<8x8x128xf32> to vector<8x128xf32>
    %c0_6 = arith.constant 0 : index
    %c0_7 = arith.constant 0 : index
    %7 = vector.load %arg4[%c0_6, %c0_7] : memref<8x128xf32, #tpu.memory_space<vmem>>, vector<8x128xf32>
    tpu.vector_store %arg4[%c0_6, %c0_7], %6 {strides = array<i32>} : memref<8x128xf32, #tpu.memory_space<vmem>>, vector<8x128xf32>,
    %8 = arith.mulf %5, %5 : vector<8x8x128xf32>
    %cst_8 = arith.constant dense<0.000000e+00> : vector<8x128xf32>
    %9 = vector.multi_reduction <add>, %8, %cst_8 [0] : vector<8x8x128xf32> to vector<8x128xf32>
    %c0_9 = arith.constant 0 : index
    %c0_10 = arith.constant 0 : index
    %10 = vector.load %arg5[%c0_9, %c0_10] : memref<8x128xf32, #tpu.memory_space<vmem>>, vector<8x128xf32>
    tpu.vector_store %arg5[%c0_9, %c0_10], %9 {strides = array<i32>} : memref<8x128xf32, #tpu.memory_space<vmem>>, vector<8x128xf32>,
    return
  }
  func.func @transform_0(%arg0: i32) -> (i32, i32) {
    %c0_i32 = arith.constant 0 : i32
    %c0_i32_0 = arith.constant 0 : i32
    return %arg0, %c0_i32 : i32, i32
  }
  func.func @transform_1(%arg0: i32) -> (i32, i32) {
    %c0_i32 = arith.constant 0 : i32
    %c0_i32_0 = arith.constant 0 : i32
    %c0_i32_1 = arith.constant 0 : i32
    return %c0_i32, %c0_i32_0 : i32, i32
  }
  func.func @transform_2(%arg0: i32) -> (i32, i32) {
    %c0_i32 = arith.constant 0 : i32
    %c0_i32_0 = arith.constant 0 : i32
    return %arg0, %c0_i32 : i32, i32
  }
  func.func @transform_3(%arg0: i32) -> (i32, i32) {
    %c0_i32 = arith.constant 0 : i32
    %c0_i32_0 = arith.constant 0 : i32
    return %arg0, %c0_i32 : i32, i32
  }
  func.func @transform_4(%arg0: i32) -> (i32, i32) {
    %c0_i32 = arith.constant 0 : i32
    %c0_i32_0 = arith.constant 0 : i32
    return %arg0, %c0_i32 : i32, i32
  }
}

</mosaic_0001>

<llo_original>
// kernel: _down_forward_impl.1
$region0: #{_down_forward_impl.1}
  #allocation0 [shape = 'u32[]', space=smem, size = 0x4, offset = 0x4, fixed_abs, tag = 'smem constant byte address 0x4 - core index']
  #allocation1 [shape = 'u32[144,128]{1,0:T(1,128)}', space=vmem, size = 0x12000, scoped, tag = 'internal scratch']
  %s0 = inlined_call_operand.vmem [shape: bf16[128,48], index: 0, kind: input, shape index: {}]
  %s1 = inlined_call_operand.vmem [shape: bf16[48,128], index: 1, kind: input, shape index: {}]
  %s2 = inlined_call_operand.vmem [shape: bf16[128,128], index: 2, kind: output, shape index: {0}]
  %s3 = inlined_call_operand.vmem [shape: f32[16,128], index: 3, kind: output, shape index: {1}]
  %s4 = inlined_call_operand.vmem [shape: f32[16,128], index: 4, kind: output, shape index: {2}]
  %5 = xla_tuple %s2, %s3, %s4
  %s6 = sld [smem:[#allocation0]]
  $region57: #{_down_forward_impl.1} parent=0
    _
  %s8 = ssub.s32 1, %s6
  %s9 = scalar_select 0, %s8, %s6
  loop: start=0, step=1, limit=4
  $region2: #{_down_forward_impl.1} parent=0 // loop_pre_header
    _
  $region3: #{_down_forward_impl.1} parent=0 // loop_header
    %s11 = sphi 0, %s15
    %p12 = scmp.ge.s32.totalorder %s11, 4
    %s21 = sphi 0, %s23
    %s24 = sphi 0, %s21
    %s25 = sphi 0, %s24
    %s41 = sphi 0, %s25
    %s45 = sphi 0, %s45
    %s47 = sphi 0, %s45
    %s48 = sphi 0, %s47
    %s62 = sphi 0, %s48
    %s68 = sphi 0, %s70
    %s71 = sphi 0, %s68
    %s72 = sphi 0, %s71
    %s88 = sphi 0, %s72
    %s94 = sphi 0, %s96
    %s97 = sphi 0, %s94
    %s98 = sphi 0, %s97
    %s114 = sphi 0, %s98
    %s120 = sphi 0, %s122
    %s123 = sphi 0, %s120
    %s124 = sphi 0, %s123
    %s140 = sphi 0, %s124
  $region4: #{_down_forward_impl.1} parent=0 // loop_header_branch
    %14 = sbr.rel (%p12) target = $region8
  $region5: #{_down_forward_impl.1} parent=0 // loop_body
    %s16 = ssub.s32 %s11, 1
    %s17 = ssub.s32 %s11, 2
    %s18 = sadd.s32 %s11, 1
    %s19 = ssub.s32 %s11, %s18
    %p20 = scmp.eq.s32.totalorder %s19, 0
    %s22 = sadd.s32 %s21, 1
    %s23 = scalar_select %p20, %s21, %s22
    %p26 = pneg %p20
    %p27 = scmp.eq.s32.totalorder %s11, 1
    %p28 = por %p26, %p27
    %p29 = scmp.ne.s32.totalorder %s21, %s24
    %p30 = scmp.eq.s32.totalorder %s11, 0
    %p31 = por %p29, %p30
    %p32 = scmp.ne.s32.totalorder %s21, %s24
    %p33 = scmp.eq.s32.totalorder %s16, 1
    %p34 = por %p32, %p33
    %p35 = scmp.ne.s32.totalorder %s24, %s25
    %p36 = scmp.eq.s32.totalorder %s16, 0
    %p37 = por %p35, %p36
    %p38 = scmp.ne.s32.totalorder %s24, %s25
    %p39 = scmp.eq.s32.totalorder %s17, 1
    %p40 = por %p38, %p39
    %p42 = scmp.ne.s32.totalorder %s25, %s41
    %p43 = scmp.eq.s32.totalorder %s17, 0
    %p44 = por %p42, %p43
    %s46 = sadd.s32 %s45, 1
    %p49 = scmp.eq.s32.totalorder %s11, 1
    %p50 = scmp.ne.s32.totalorder %s45, %s47
    %p51 = scmp.eq.s32.totalorder %s11, 0
    %p52 = por %p50, %p51
    %p53 = scmp.ne.s32.totalorder %s45, %s47
    %p54 = scmp.eq.s32.totalorder %s16, 1
    %p55 = por %p53, %p54
    %p56 = scmp.ne.s32.totalorder %s47, %s48
    %p57 = scmp.eq.s32.totalorder %s16, 0
    %p58 = por %p56, %p57
    %p59 = scmp.ne.s32.totalorder %s47, %s48
    %p60 = scmp.eq.s32.totalorder %s17, 1
    %p61 = por %p59, %p60
    %p63 = scmp.ne.s32.totalorder %s48, %s62
    %p64 = scmp.eq.s32.totalorder %s17, 0
    %p65 = por %p63, %p64
    %s66 = ssub.s32 %s11, %s18
    %p67 = scmp.eq.s32.totalorder %s66, 0
    %s69 = sadd.s32 %s68, 1
    %s70 = scalar_select %p67, %s68, %s69
    %p73 = pneg %p67
    %p74 = scmp.eq.s32.totalorder %s11, 1
    %p75 = por %p73, %p74
    %p76 = scmp.ne.s32.totalorder %s68, %s71
    %p77 = scmp.eq.s32.totalorder %s11, 0
    %p78 = por %p76, %p77
    %p79 = scmp.ne.s32.totalorder %s68, %s71
    %p80 = scmp.eq.s32.totalorder %s16, 1
    %p81 = por %p79, %p80
    %p82 = scmp.ne.s32.totalorder %s71, %s72
    %p83 = scmp.eq.s32.totalorder %s16, 0
    %p84 = por %p82, %p83
    %p85 = scmp.ne.s32.totalorder %s71, %s72
    %p86 = scmp.eq.s32.totalorder %s17, 1
    %p87 = por %p85, %p86
    %p89 = scmp.ne.s32.totalorder %s72, %s88
    %p90 = scmp.eq.s32.totalorder %s17, 0
    %p91 = por %p89, %p90
    %s92 = ssub.s32 %s11, %s18
    %p93 = scmp.eq.s32.totalorder %s92, 0
    %s95 = sadd.s32 %s94, 1
    %s96 = scalar_select %p93, %s94, %s95
    %p99 = pneg %p93
    %p100 = scmp.eq.s32.totalorder %s11, 1
    %p101 = por %p99, %p100
    %p102 = scmp.ne.s32.totalorder %s94, %s97
    %p103 = scmp.eq.s32.totalorder %s11, 0
    %p104 = por %p102, %p103
    %p105 = scmp.ne.s32.totalorder %s94, %s97
    %p106 = scmp.eq.s32.totalorder %s16, 1
    %p107 = por %p105, %p106
    %p108 = scmp.ne.s32.totalorder %s97, %s98
    %p109 = scmp.eq.s32.totalorder %s16, 0
    %p110 = por %p108, %p109
    %p111 = scmp.ne.s32.totalorder %s97, %s98
    %p112 = scmp.eq.s32.totalorder %s17, 1
    %p113 = por %p111, %p112
    %p115 = scmp.ne.s32.totalorder %s98, %s114
    %p116 = scmp.eq.s32.totalorder %s17, 0
    %p117 = por %p115, %p116
    %s118 = ssub.s32 %s11, %s18
    %p119 = scmp.eq.s32.totalorder %s118, 0
    %s121 = sadd.s32 %s120, 1
    %s122 = scalar_select %p119, %s120, %s121
    %p125 = pneg %p119
    %p126 = scmp.eq.s32.totalorder %s11, 1
    %p127 = por %p125, %p126
    %p128 = scmp.ne.s32.totalorder %s120, %s123
    %p129 = scmp.eq.s32.totalorder %s11, 0
    %p130 = por %p128, %p129
    %p131 = scmp.ne.s32.totalorder %s120, %s123
    %p132 = scmp.eq.s32.totalorder %s16, 1
    %p133 = por %p131, %p132
    %p134 = scmp.ne.s32.totalorder %s123, %s124
    %p135 = scmp.eq.s32.totalorder %s16, 0
    %p136 = por %p134, %p135
    %p137 = scmp.ne.s32.totalorder %s123, %s124
    %p138 = scmp.eq.s32.totalorder %s17, 1
    %p139 = por %p137, %p138
    %p141 = scmp.ne.s32.totalorder %s124, %s140
    %p142 = scmp.eq.s32.totalorder %s17, 0
    %p143 = por %p141, %p142
    %p144 = scmp.le.s32.totalorder 1, %s11
    %p145 = scmp.lt.s32.totalorder %s11, 3
    %p146 = pnand %p144, %p145
    %p147 = pneg %p146
    // Predicated region
    $region9: #{_down_forward_impl.1} parent=5 // pred_check
      _
    $region10: #{_down_forward_impl.1} parent=5 // pred_check_branch
      %149 = sbr.rel (%p146) target = $region12
    $region11: #{_down_forward_impl.1} parent=5 // pred_region
      %s150 = ssub.s32 %s11, 1
      // Predicated region
      $region13: #{_down_forward_impl.1} parent=11 // pred_check
        %p151 = pneg %p58
      $region14: #{_down_forward_impl.1} parent=11 // pred_check_branch
        %153 = sbr.rel (%p151) target = $region16
      $region15: #{_down_forward_impl.1} parent=11 // pred_region
        _
      $region16: #{_down_forward_impl.1} parent=11 // pred_fallthru
        _
    $region12: #{_down_forward_impl.1} parent=5 // pred_fallthru
      _
    %p154 = scmp.lt.s32.totalorder %s11, 2
    // Predicated region
    $region17: #{_down_forward_impl.1} parent=5 // pred_check
      %p155 = pneg %p154
    $region18: #{_down_forward_impl.1} parent=5 // pred_check_branch
      %157 = sbr.rel (%p155) target = $region20
    $region19: #{_down_forward_impl.1} parent=5 // pred_region
      // Predicated region
      $region21: #{_down_forward_impl.1} parent=19 // pred_check
        %p158 = pneg %p31
      $region22: #{_down_forward_impl.1} parent=19 // pred_check_branch
        %160 = sbr.rel (%p158) target = $region24
      $region23: #{_down_forward_impl.1} parent=19 // pred_region
        %s161 = smul.u32 8, %s11
        %p162 = scmp.lt.s32.totalorder %s161, 15
        %s163 = scalar_select %p162, %s161, 15
        %s164 = smul.addr %s163, 4
        %s165 = scalar_lea.vmem %s0, %s164
        %s166 = smul.u32 8, %s11
      $region24: #{_down_forward_impl.1} parent=19 // pred_fallthru
        _
    $region20: #{_down_forward_impl.1} parent=5 // pred_fallthru
      _
    %p167 = scmp.le.s32.totalorder 1, %s11
    %p168 = scmp.lt.s32.totalorder %s11, 3
    %p169 = pnand %p167, %p168
    %p170 = pneg %p169
    // Predicated region
    $region25: #{_down_forward_impl.1} parent=5 // pred_check
      _
    $region26: #{_down_forward_impl.1} parent=5 // pred_check_branch
      %172 = sbr.rel (%p169) target = $region28
    $region27: #{_down_forward_impl.1} parent=5 // pred_region
      %s173 = ssub.s32 %s11, 1
      %s174 = smul.u32 8, %s16
      %p175 = scmp.lt.s32.totalorder %s174, 15
      %s176 = scalar_select %p175, %s174, 15
      %s177 = smul.addr %s176, 4
      %s178 = scalar_lea.vmem %s0, %s177
      %p179 = pneg %p37
      %p180 = pneg %p34
      %p181 = pneg %p58
      %p182 = pneg %p55
      %p183 = pneg %p84
      %p184 = pneg %p81
      %s185 = smul.u32 8, %s16
      %p186 = scmp.lt.s32.totalorder %s185, 15
      %s187 = scalar_select %p186, %s185, 15
      %s188 = smul.addr %s187, 4
      %s189 = scalar_lea.vmem %s2, %s188
      %p190 = pneg %p110
      %p191 = pneg %p107
      %p192 = scmp.lt.s32.totalorder %s16, 1
      %s193 = scalar_select %p192, %s16, 1
      %s194 = smul.addr %s193, 8
      %s195 = scalar_lea.vmem %s3, %s194
      %p196 = pneg %p136
      %p197 = pneg %p133
      %p198 = scmp.lt.s32.totalorder %s16, 1
      %s199 = scalar_select %p198, %s16, 1
      %s200 = smul.addr %s199, 8
      %s201 = scalar_lea.vmem %s4, %s200
      %s202 = smul.u32 8, %s16
      %p203 = scmp.lt.s32.totalorder %s202, 15
      %s204 = scalar_select %p203, %s202, 15
      %s205 = smul.addr %s204, 4
      %s206 = scalar_lea.vmem %s0, %s205
      %s207 = smul.u32 8, %s16
      %s208 = smul.u32 8, %s16
      %p209 = scmp.lt.s32.totalorder %s208, 15
      %s210 = scalar_select %p209, %s208, 15
      %s211 = smul.addr %s210, 4
      %s212 = scalar_lea.vmem %s2, %s211
      %s213 = smul.u32 8, %s16
      %p214 = scmp.lt.s32.totalorder %s16, 1
      %s215 = scalar_select %p214, %s16, 1
      %s216 = smul.addr %s215, 8
      %s217 = scalar_lea.vmem %s3, %s216
      %p218 = scmp.lt.s32.totalorder %s16, 1
      %s219 = scalar_select %p218, %s16, 1
      %s220 = smul.addr %s219, 8
      %s221 = scalar_lea.vmem %s4, %s220
      %v223 = vld [vmem:[%s206] sm:$0xf]
      %v224 = vld [vmem:[%s206 + $0x4] sm:$0xf]
      %v225 = vld [vmem:[%s206 + $0x8] sm:$0xf]
      %v226 = vld [vmem:[%s206 + $0xc] sm:$0xf]
      %v227 = vld [vmem:[%s206 + $0x10] sm:$0xf]
      %v228 = vld [vmem:[%s206 + $0x14] sm:$0xf]
      %v229 = vld [vmem:[%s206 + $0x18] sm:$0xf]
      %v230 = vld [vmem:[%s206 + $0x1c] sm:$0xf]
      %v231 = vld [vmem:[%s1] sm:$0xf]
      %v232 = vld [vmem:[%s1 + $0x4] sm:$0xf]
      %v233 = vld [vmem:[%s1 + $0x8] sm:$0xf]
      %v234 = vld [vmem:[%s1 + $0xc] sm:$0xf]
      %v235 = vld [vmem:[%s1 + $0x10] sm:$0xf]
      %v236 = vld [vmem:[%s1 + $0x14] sm:$0xf]
      %v245 = vunpack.c.l.b16 %v223
      %v246 = vunpack.c.l.b16 %v224
      %v247 = vunpack.c.l.b16 %v225
      %v248 = vunpack.c.l.b16 %v226
      %v249 = vunpack.c.l.b16 %v227
      %v250 = vunpack.c.l.b16 %v228
      %v251 = vunpack.c.l.b16 %v229
      %v252 = vunpack.c.l.b16 %v230
      %v253 = vpack.c.b16 %v246, %v245
      %v254 = vpack.c.b16 %v248, %v247
      %v255 = vpack.c.b16 %v250, %v249
      %v256 = vpack.c.b16 %v252, %v251
      %v263 = vunpack.c.l.b16 %v231
      %v264 = vunpack.c.l.b16 %v232
      %v265 = vunpack.c.l.b16 %v233
      %v266 = vunpack.c.l.b16 %v234
      %v267 = vunpack.c.l.b16 %v235
      %v268 = vunpack.c.l.b16 %v236
      %v269 = vpack.c.b16 %v264, %v263
      %v270 = vpack.c.b16 %v266, %v265
      %v271 = vpack.c.b16 %v268, %v267
      %vm275 = vcmask 392192
      %v277 = vsel %vm275, %v253, 0
      %v280 = vsel %vm275, %v254, 0
      %v283 = vsel %vm275, %v255, 0
      %v286 = vsel %vm275, %v256, 0
      %288 = vmatprep.subr.bf16.mxu0 0
      %289 = vmatpush1.bf16.msra.mxu0 %v269
      %290 = vmatprep.subr.bf16.mxu0 0
      %291 = vmatpush1.bf16.msra.mxu0 %v270
      %292 = vmatprep.subr.bf16.mxu0 0
      %293 = vmatpush1.bf16.msra.mxu0 %v271
      %294 = vmatprep.subr.bf16.mxu0 0
      %295 = vmatpush1.bf16.msra.mxu0 0
      %296 = vmatprep.subr.bf16.mxu0 0
      %297 = vmatpush1.bf16.msra.mxu0 0
      %298 = vmatprep.subr.bf16.mxu0 0
      %299 = vmatpush1.bf16.msra.mxu0 0
      %300 = vmatprep.subr.bf16.mxu0 0
      %301 = vmatpush1.bf16.msra.mxu0 0
      %302 = vmatprep.subr.bf16.mxu0 0
      %303 = vmatpush1.bf16.msra.mxu0 0
      %304 = vmatprep.subr.bf16.mxu0 0
      %305 = vmatpush1.bf16.msra.mxu0 0
      %306 = vmatprep.subr.bf16.mxu0 0
      %307 = vmatpush1.bf16.msra.mxu0 0
      %308 = vmatprep.subr.bf16.mxu0 0
      %309 = vmatpush1.bf16.msra.mxu0 0
      %310 = vmatprep.subr.bf16.mxu0 0
      %311 = vmatpush1.bf16.msra.mxu0 0
      %312 = vmatprep.subr.bf16.mxu0 0
      %313 = vmatpush1.bf16.msra.mxu0 0
      %314 = vmatprep.subr.bf16.mxu0 0
      %315 = vmatpush1.bf16.msra.mxu0 0
      %316 = vmatprep.subr.bf16.mxu0 0
      %317 = vmatpush1.bf16.msra.mxu0 0
      %318 = vmatprep.subr.bf16.mxu0 0
      %319 = vmatpush1.bf16.msra.mxu0 0
      %320 = vmatprep.mubr.bf16.mxu0 0
      %321 = vmatmul.mubr.bf16.gmra.mrb[0].mxu0 %v277
      %v322 = vpop.f32.mrb[0].mxu0
      %v323 = vadd.f32 0.0, %v322
      %v324 = vpop.f32.mrb[0].mxu0
      %v325 = vpop.f32.mrb[0].mxu0
      %v326 = vadd.f32 0.0, %v325
      %v327 = vpop.f32.mrb[0].mxu0
      %328 = vmatprep.mubr.bf16.mxu0 0
      %329 = vmatmul.mubr.bf16.gmra.mrb[0].mxu0 %v280
      %v330 = vpop.f32.mrb[0].mxu0
      %v331 = vadd.f32 0.0, %v330
      %v332 = vpop.f32.mrb[0].mxu0
      %v333 = vpop.f32.mrb[0].mxu0
      %v334 = vadd.f32 0.0, %v333
      %v335 = vpop.f32.mrb[0].mxu0
      %336 = vmatprep.mubr.bf16.mxu0 0
      %337 = vmatmul.mubr.bf16.gmra.mrb[0].mxu0 %v283
      %v338 = vpop.f32.mrb[0].mxu0
      %v339 = vadd.f32 0.0, %v338
      %v340 = vpop.f32.mrb[0].mxu0
      %v341 = vpop.f32.mrb[0].mxu0
      %v342 = vadd.f32 0.0, %v341
      %v343 = vpop.f32.mrb[0].mxu0
      %344 = vmatprep.mubr.bf16.mxu0 0
      %345 = vmatmul.mubr.bf16.gmra.mrb[0].mxu0 %v286
      %v346 = vpop.f32.mrb[0].mxu0
      %v347 = vadd.f32 0.0, %v346
      %v348 = vpop.f32.mrb[0].mxu0
      %v349 = vpop.f32.mrb[0].mxu0
      %v350 = vadd.f32 0.0, %v349
      %v351 = vpop.f32.mrb[0].mxu0
      %352 = vdwg.mxu0
      %v353 = vpack.c.bf16 %v326, %v323
      %v354 = vpack.c.bf16 %v334, %v331
      %v355 = vpack.c.bf16 %v342, %v339
      %v356 = vpack.c.bf16 %v350, %v347
      %v361 = vunpack.c.l.b16 %v353
      %v362 = vunpack.c.h.b16 %v353
      %v363 = vunpack.c.l.b16 %v354
      %v364 = vunpack.c.h.b16 %v354
      %v365 = vunpack.c.l.b16 %v355
      %v366 = vunpack.c.h.b16 %v355
      %v367 = vunpack.c.l.b16 %v356
      %v368 = vunpack.c.h.b16 %v356
      %v369 = vpack.c.b16 %v361, %v361
      %v370 = vpack.c.b16 %v362, %v362
      %v371 = vpack.c.b16 %v363, %v363
      %v372 = vpack.c.b16 %v364, %v364
      %v373 = vpack.c.b16 %v365, %v365
      %v374 = vpack.c.b16 %v366, %v366
      %v375 = vpack.c.b16 %v367, %v367
      %v376 = vpack.c.b16 %v368, %v368
      %385 = vst [vmem:[%s212] sm:$0xf] %v369
      %386 = vst [vmem:[%s212 + $0x4] sm:$0xf] %v370
      %387 = vst [vmem:[%s212 + $0x8] sm:$0xf] %v371
      %388 = vst [vmem:[%s212 + $0xc] sm:$0xf] %v372
      %389 = vst [vmem:[%s212 + $0x10] sm:$0xf] %v373
      %390 = vst [vmem:[%s212 + $0x14] sm:$0xf] %v374
      %391 = vst [vmem:[%s212 + $0x18] sm:$0xf] %v375
      %392 = vst [vmem:[%s212 + $0x1c] sm:$0xf] %v376
      %v393 = vadd.f32 %v323, %v326
      %v394 = vadd.f32 %v393, %v331
      %v395 = vadd.f32 %v394, %v334
      %v396 = vadd.f32 %v395, %v339
      %v397 = vadd.f32 %v396, %v342
      %v398 = vadd.f32 %v397, %v347
      %v399 = vadd.f32 %v398, %v350
      %400 = vst [vmem:[%s217] sm:$0xff] %v399
      %v401 = vmul.f32 %v323, %v323
      %v402 = vmul.f32 %v326, %v326
      %v403 = vmul.f32 %v331, %v331
      %v404 = vmul.f32 %v334, %v334
      %v405 = vmul.f32 %v339, %v339
      %v406 = vmul.f32 %v342, %v342
      %v407 = vmul.f32 %v347, %v347
      %v408 = vmul.f32 %v350, %v350
      %v409 = vadd.f32 %v401, %v402
      %v410 = vadd.f32 %v409, %v403
      %v411 = vadd.f32 %v410, %v404
      %v412 = vadd.f32 %v411, %v405
      %v413 = vadd.f32 %v412, %v406
      %v414 = vadd.f32 %v413, %v407
      %v415 = vadd.f32 %v414, %v408
      %416 = vst [vmem:[%s221] sm:$0xff] %v415
      %s417 = smul.u32 8, %s16
      %p418 = scmp.lt.s32.totalorder %s417, 15
      %s419 = scalar_select %p418, %s417, 15
      %s420 = smul.addr %s419, 4
      %s421 = scalar_lea.vmem %s2, %s420
      %p422 = scmp.lt.s32.totalorder %s16, 1
      %s423 = scalar_select %p422, %s16, 1
      %s424 = smul.addr %s423, 8
      %s425 = scalar_lea.vmem %s3, %s424
      %p426 = scmp.lt.s32.totalorder %s16, 1
      %s427 = scalar_select %p426, %s16, 1
      %s428 = smul.addr %s427, 8
      %s429 = scalar_lea.vmem %s4, %s428
      // Predicated region
      $region29: #{_down_forward_impl.1} parent=27 // pred_check
        %p430 = pneg %p81
      $region30: #{_down_forward_impl.1} parent=27 // pred_check_branch
        %432 = sbr.rel (%p430) target = $region32
      $region31: #{_down_forward_impl.1} parent=27 // pred_region
        %s433 = smul.u32 8, %s16
      $region32: #{_down_forward_impl.1} parent=27 // pred_fallthru
        _
      // Predicated region
      $region33: #{_down_forward_impl.1} parent=27 // pred_check
        %p434 = pneg %p107
      $region34: #{_down_forward_impl.1} parent=27 // pred_check_branch
        %436 = sbr.rel (%p434) target = $region36
      $region35: #{_down_forward_impl.1} parent=27 // pred_region
        _
      $region36: #{_down_forward_impl.1} parent=27 // pred_fallthru
        _
      // Predicated region
      $region37: #{_down_forward_impl.1} parent=27 // pred_check
        %p437 = pneg %p133
      $region38: #{_down_forward_impl.1} parent=27 // pred_check_branch
        %439 = sbr.rel (%p437) target = $region40
      $region39: #{_down_forward_impl.1} parent=27 // pred_region
        _
      $region40: #{_down_forward_impl.1} parent=27 // pred_fallthru
        _
    $region28: #{_down_forward_impl.1} parent=5 // pred_fallthru
      _
    %p440 = scmp.le.s32.totalorder 2, %s11
    // Predicated region
    $region41: #{_down_forward_impl.1} parent=5 // pred_check
      %p441 = pneg %p440
    $region42: #{_down_forward_impl.1} parent=5 // pred_check_branch
      %443 = sbr.rel (%p441) target = $region44
    $region43: #{_down_forward_impl.1} parent=5 // pred_region
      %s444 = ssub.s32 %s11, 2
      // Predicated region
      $region45: #{_down_forward_impl.1} parent=43 // pred_check
        %p445 = pneg %p87
      $region46: #{_down_forward_impl.1} parent=43 // pred_check_branch
        %447 = sbr.rel (%p445) target = $region48
      $region47: #{_down_forward_impl.1} parent=43 // pred_region
        %s448 = smul.u32 8, %s17
        %p449 = scmp.lt.s32.totalorder %s448, 15
        %s450 = scalar_select %p449, %s448, 15
        %s451 = smul.addr %s450, 4
        %s452 = scalar_lea.vmem %s2, %s451
      $region48: #{_down_forward_impl.1} parent=43 // pred_fallthru
        _
      // Predicated region
      $region49: #{_down_forward_impl.1} parent=43 // pred_check
        %p453 = pneg %p113
      $region50: #{_down_forward_impl.1} parent=43 // pred_check_branch
        %455 = sbr.rel (%p453) target = $region52
      $region51: #{_down_forward_impl.1} parent=43 // pred_region
        %p456 = scmp.lt.s32.totalorder %s17, 1
        %s457 = scalar_select %p456, %s17, 1
        %s458 = smul.addr %s457, 8
        %s459 = scalar_lea.vmem %s3, %s458
      $region52: #{_down_forward_impl.1} parent=43 // pred_fallthru
        _
      // Predicated region
      $region53: #{_down_forward_impl.1} parent=43 // pred_check
        %p460 = pneg %p139
      $region54: #{_down_forward_impl.1} parent=43 // pred_check_branch
        %462 = sbr.rel (%p460) target = $region56
      $region55: #{_down_forward_impl.1} parent=43 // pred_region
        %p463 = scmp.lt.s32.totalorder %s17, 1
        %s464 = scalar_select %p463, %s17, 1
        %s465 = smul.addr %s464, 8
        %s466 = scalar_lea.vmem %s4, %s465
      $region56: #{_down_forward_impl.1} parent=43 // pred_fallthru
        _
    $region44: #{_down_forward_impl.1} parent=5 // pred_fallthru
      _
  $region6: #{_down_forward_impl.1} parent=0 // loop_footer
    %s15 = sadd.s32 1, %s11
  $region7: #{_down_forward_impl.1} parent=0 // loop_footer_branch
    %10 = sbr.rel target = $region3
  $region8: #{_down_forward_impl.1} parent=0 // loop_exit
    _

// kernel: _down_forward_impl.1
$region0: #{_down_forward_impl.1}
  #allocation0 [shape = 'u32[]', space=smem, size = 0x4, offset = 0x4, fixed_abs, tag = 'smem constant byte address 0x4 - core index']
  #allocation1 [shape = 'u32[144,128]{1,0:T(1,128)}', space=vmem, size = 0x12000, scoped, tag = 'internal scratch']
  %s0 = inlined_call_operand.vmem [shape: bf16[128,48], index: 0, kind: input, shape index: {}]
  %s1 = inlined_call_operand.vmem [shape: bf16[48,128], index: 1, kind: input, shape index: {}]
  %s2 = inlined_call_operand.vmem [shape: bf16[128,128], index: 2, kind: output, shape index: {0}]
  %s3 = inlined_call_operand.vmem [shape: f32[16,128], index: 3, kind: output, shape index: {1}]
  %s4 = inlined_call_operand.vmem [shape: f32[16,128], index: 4, kind: output, shape index: {2}]
  %5 = xla_tuple %s2, %s3, %s4
  %s6 = sld [smem:[#allocation0]]
  $region57: #{_down_forward_impl.1} parent=0
    _
  %s8 = ssub.s32 1, %s6
  %s9 = scalar_select 0, %s8, %s6
  loop: start=0, step=1, limit=4
  $region2: #{_down_forward_impl.1} parent=0 // loop_pre_header
    _
  $region3: #{_down_forward_impl.1} parent=0 // loop_header
    %s11 = sphi 0, %s15
    %p12 = scmp.ge.s32.totalorder %s11, 4
    %s21 = sphi 0, %s23
    %s24 = sphi 0, %s21
    %s25 = sphi 0, %s24
    %s41 = sphi 0, %s25
    %s45 = sphi 0, %s45
    %s47 = sphi 0, %s45
    %s48 = sphi 0, %s47
    %s62 = sphi 0, %s48
    %s68 = sphi 0, %s70
    %s71 = sphi 0, %s68
    %s72 = sphi 0, %s71
    %s88 = sphi 0, %s72
    %s94 = sphi 0, %s96
    %s97 = sphi 0, %s94
    %s98 = sphi 0, %s97
    %s114 = sphi 0, %s98
    %s120 = sphi 0, %s122
    %s123 = sphi 0, %s120
    %s124 = sphi 0, %s123
    %s140 = sphi 0, %s124
  $region4: #{_down_forward_impl.1} parent=0 // loop_header_branch
    %14 = sbr.rel (%p12) target = $region8
  $region5: #{_down_forward_impl.1} parent=0 // loop_body
    %s16 = ssub.s32 %s11, 1
    %s17 = ssub.s32 %s11, 2
    %s18 = sadd.s32 %s11, 1
    %s19 = ssub.s32 %s11, %s18
    %p20 = scmp.eq.s32.totalorder %s19, 0
    %s22 = sadd.s32 %s21, 1
    %s23 = scalar_select %p20, %s21, %s22
    %p26 = pneg %p20
    %p27 = scmp.eq.s32.totalorder %s11, 1
    %p28 = por %p26, %p27
    %p29 = scmp.ne.s32.totalorder %s21, %s24
    %p30 = scmp.eq.s32.totalorder %s11, 0
    %p31 = por %p29, %p30
    %p32 = scmp.ne.s32.totalorder %s21, %s24
    %p33 = scmp.eq.s32.totalorder %s16, 1
    %p34 = por %p32, %p33
    %p35 = scmp.ne.s32.totalorder %s24, %s25
    %p36 = scmp.eq.s32.totalorder %s16, 0
    %p37 = por %p35, %p36
    %p38 = scmp.ne.s32.totalorder %s24, %s25
    %p39 = scmp.eq.s32.totalorder %s17, 1
    %p40 = por %p38, %p39
    %p42 = scmp.ne.s32.totalorder %s25, %s41
    %p43 = scmp.eq.s32.totalorder %s17, 0
    %p44 = por %p42, %p43
    %s46 = sadd.s32 %s45, 1
    %p49 = scmp.eq.s32.totalorder %s11, 1
    %p50 = scmp.ne.s32.totalorder %s45, %s47
    %p51 = scmp.eq.s32.totalorder %s11, 0
    %p52 = por %p50, %p51
    %p53 = scmp.ne.s32.totalorder %s45, %s47
    %p54 = scmp.eq.s32.totalorder %s16, 1
    %p55 = por %p53, %p54
    %p56 = scmp.ne.s32.totalorder %s47, %s48
    %p57 = scmp.eq.s32.totalorder %s16, 0
    %p58 = por %p56, %p57
    %p59 = scmp.ne.s32.totalorder %s47, %s48
    %p60 = scmp.eq.s32.totalorder %s17, 1
    %p61 = por %p59, %p60
    %p63 = scmp.ne.s32.totalorder %s48, %s62
    %p64 = scmp.eq.s32.totalorder %s17, 0
    %p65 = por %p63, %p64
    %s66 = ssub.s32 %s11, %s18
    %p67 = scmp.eq.s32.totalorder %s66, 0
    %s69 = sadd.s32 %s68, 1
    %s70 = scalar_select %p67, %s68, %s69
    %p73 = pneg %p67
    %p74 = scmp.eq.s32.totalorder %s11, 1
    %p75 = por %p73, %p74
    %p76 = scmp.ne.s32.totalorder %s68, %s71
    %p77 = scmp.eq.s32.totalorder %s11, 0
    %p78 = por %p76, %p77
    %p79 = scmp.ne.s32.totalorder %s68, %s71
    %p80 = scmp.eq.s32.totalorder %s16, 1
    %p81 = por %p79, %p80
    %p82 = scmp.ne.s32.totalorder %s71, %s72
    %p83 = scmp.eq.s32.totalorder %s16, 0
    %p84 = por %p82, %p83
    %p85 = scmp.ne.s32.totalorder %s71, %s72
    %p86 = scmp.eq.s32.totalorder %s17, 1
    %p87 = por %p85, %p86
    %p89 = scmp.ne.s32.totalorder %s72, %s88
    %p90 = scmp.eq.s32.totalorder %s17, 0
    %p91 = por %p89, %p90
    %s92 = ssub.s32 %s11, %s18
    %p93 = scmp.eq.s32.totalorder %s92, 0
    %s95 = sadd.s32 %s94, 1
    %s96 = scalar_select %p93, %s94, %s95
    %p99 = pneg %p93
    %p100 = scmp.eq.s32.totalorder %s11, 1
    %p101 = por %p99, %p100
    %p102 = scmp.ne.s32.totalorder %s94, %s97
    %p103 = scmp.eq.s32.totalorder %s11, 0
    %p104 = por %p102, %p103
    %p105 = scmp.ne.s32.totalorder %s94, %s97
    %p106 = scmp.eq.s32.totalorder %s16, 1
    %p107 = por %p105, %p106
    %p108 = scmp.ne.s32.totalorder %s97, %s98
    %p109 = scmp.eq.s32.totalorder %s16, 0
    %p110 = por %p108, %p109
    %p111 = scmp.ne.s32.totalorder %s97, %s98
    %p112 = scmp.eq.s32.totalorder %s17, 1
    %p113 = por %p111, %p112
    %p115 = scmp.ne.s32.totalorder %s98, %s114
    %p116 = scmp.eq.s32.totalorder %s17, 0
    %p117 = por %p115, %p116
    %s118 = ssub.s32 %s11, %s18
    %p119 = scmp.eq.s32.totalorder %s118, 0
    %s121 = sadd.s32 %s120, 1
    %s122 = scalar_select %p119, %s120, %s121
    %p125 = pneg %p119
    %p126 = scmp.eq.s32.totalorder %s11, 1
    %p127 = por %p125, %p126
    %p128 = scmp.ne.s32.totalorder %s120, %s123
    %p129 = scmp.eq.s32.totalorder %s11, 0
    %p130 = por %p128, %p129
    %p131 = scmp.ne.s32.totalorder %s120, %s123
    %p132 = scmp.eq.s32.totalorder %s16, 1
    %p133 = por %p131, %p132
    %p134 = scmp.ne.s32.totalorder %s123, %s124
    %p135 = scmp.eq.s32.totalorder %s16, 0
    %p136 = por %p134, %p135
    %p137 = scmp.ne.s32.totalorder %s123, %s124
    %p138 = scmp.eq.s32.totalorder %s17, 1
    %p139 = por %p137, %p138
    %p141 = scmp.ne.s32.totalorder %s124, %s140
    %p142 = scmp.eq.s32.totalorder %s17, 0
    %p143 = por %p141, %p142
    %p144 = scmp.le.s32.totalorder 1, %s11
    %p145 = scmp.lt.s32.totalorder %s11, 3
    %p146 = pnand %p144, %p145
    %p147 = pneg %p146
    // Predicated region
    $region9: #{_down_forward_impl.1} parent=5 // pred_check
      _
    $region10: #{_down_forward_impl.1} parent=5 // pred_check_branch
      %149 = sbr.rel (%p146) target = $region12
    $region11: #{_down_forward_impl.1} parent=5 // pred_region
      %s150 = ssub.s32 %s11, 1
      // Predicated region
      $region13: #{_down_forward_impl.1} parent=11 // pred_check
        %p151 = pneg %p58
      $region14: #{_down_forward_impl.1} parent=11 // pred_check_branch
        %153 = sbr.rel (%p151) target = $region16
      $region15: #{_down_forward_impl.1} parent=11 // pred_region
        _
      $region16: #{_down_forward_impl.1} parent=11 // pred_fallthru
        _
    $region12: #{_down_forward_impl.1} parent=5 // pred_fallthru
      _
    %p154 = scmp.lt.s32.totalorder %s11, 2
    // Predicated region
    $region17: #{_down_forward_impl.1} parent=5 // pred_check
      %p155 = pneg %p154
    $region18: #{_down_forward_impl.1} parent=5 // pred_check_branch
      %157 = sbr.rel (%p155) target = $region20
    $region19: #{_down_forward_impl.1} parent=5 // pred_region
      // Predicated region
      $region21: #{_down_forward_impl.1} parent=19 // pred_check
        %p158 = pneg %p31
      $region22: #{_down_forward_impl.1} parent=19 // pred_check_branch
        %160 = sbr.rel (%p158) target = $region24
      $region23: #{_down_forward_impl.1} parent=19 // pred_region
        %s161 = smul.u32 8, %s11
        %p162 = scmp.lt.s32.totalorder %s161, 15
        %s163 = scalar_select %p162, %s161, 15
        %s164 = smul.addr %s163, 4
        %s165 = scalar_lea.vmem %s0, %s164
        %s166 = smul.u32 8, %s11
      $region24: #{_down_forward_impl.1} parent=19 // pred_fallthru
        _
    $region20: #{_down_forward_impl.1} parent=5 // pred_fallthru
      _
    %p167 = scmp.le.s32.totalorder 1, %s11
    %p168 = scmp.lt.s32.totalorder %s11, 3
    %p169 = pnand %p167, %p168
    %p170 = pneg %p169
    // Predicated region
    $region25: #{_down_forward_impl.1} parent=5 // pred_check
      _
    $region26: #{_down_forward_impl.1} parent=5 // pred_check_branch
      %172 = sbr.rel (%p169) target = $region28
    $region27: #{_down_forward_impl.1} parent=5 // pred_region
      %s173 = ssub.s32 %s11, 1
      %s174 = smul.u32 8, %s16
      %p175 = scmp.lt.s32.totalorder %s174, 15
      %s176 = scalar_select %p175, %s174, 15
      %s177 = smul.addr %s176, 4
      %s178 = scalar_lea.vmem %s0, %s177
      %p179 = pneg %p37
      %p180 = pneg %p34
      %p181 = pneg %p58
      %p182 = pneg %p55
      %p183 = pneg %p84
      %p184 = pneg %p81
      %s185 = smul.u32 8, %s16
      %p186 = scmp.lt.s32.totalorder %s185, 15
      %s187 = scalar_select %p186, %s185, 15
      %s188 = smul.addr %s187, 4
      %s189 = scalar_lea.vmem %s2, %s188
      %p190 = pneg %p110
      %p191 = pneg %p107
      %p192 = scmp.lt.s32.totalorder %s16, 1
      %s193 = scalar_select %p192, %s16, 1
      %s194 = smul.addr %s193, 8
      %s195 = scalar_lea.vmem %s3, %s194
      %p196 = pneg %p136
      %p197 = pneg %p133
      %p198 = scmp.lt.s32.totalorder %s16, 1
      %s199 = scalar_select %p198, %s16, 1
      %s200 = smul.addr %s199, 8
      %s201 = scalar_lea.vmem %s4, %s200
      %s202 = smul.u32 8, %s16
      %p203 = scmp.lt.s32.totalorder %s202, 15
      %s204 = scalar_select %p203, %s202, 15
      %s205 = smul.addr %s204, 4
      %s206 = scalar_lea.vmem %s0, %s205
      %s207 = smul.u32 8, %s16
      %s208 = smul.u32 8, %s16
      %p209 = scmp.lt.s32.totalorder %s208, 15
      %s210 = scalar_select %p209, %s208, 15
      %s211 = smul.addr %s210, 4
      %s212 = scalar_lea.vmem %s2, %s211
      %s213 = smul.u32 8, %s16
      %p214 = scmp.lt.s32.totalorder %s16, 1
      %s215 = scalar_select %p214, %s16, 1
      %s216 = smul.addr %s215, 8
      %s217 = scalar_lea.vmem %s3, %s216
      %p218 = scmp.lt.s32.totalorder %s16, 1
      %s219 = scalar_select %p218, %s16, 1
      %s220 = smul.addr %s219, 8
      %s221 = scalar_lea.vmem %s4, %s220
      %v223 = vld [vmem:[%s206] sm:$0xf]
      %v224 = vld [vmem:[%s206 + $0x4] sm:$0xf]
      %v225 = vld [vmem:[%s206 + $0x8] sm:$0xf]
      %v226 = vld [vmem:[%s206 + $0xc] sm:$0xf]
      %v227 = vld [vmem:[%s206 + $0x10] sm:$0xf]
      %v228 = vld [vmem:[%s206 + $0x14] sm:$0xf]
      %v229 = vld [vmem:[%s206 + $0x18] sm:$0xf]
      %v230 = vld [vmem:[%s206 + $0x1c] sm:$0xf]
      %v231 = vld [vmem:[%s1] sm:$0xf]
      %v232 = vld [vmem:[%s1 + $0x4] sm:$0xf]
      %v233 = vld [vmem:[%s1 + $0x8] sm:$0xf]
      %v234 = vld [vmem:[%s1 + $0xc] sm:$0xf]
      %v235 = vld [vmem:[%s1 + $0x10] sm:$0xf]
      %v236 = vld [vmem:[%s1 + $0x14] sm:$0xf]
      %v245 = vunpack.c.l.b16 %v223
      %v246 = vunpack.c.l.b16 %v224
      %v247 = vunpack.c.l.b16 %v225
      %v248 = vunpack.c.l.b16 %v226
      %v249 = vunpack.c.l.b16 %v227
      %v250 = vunpack.c.l.b16 %v228
      %v251 = vunpack.c.l.b16 %v229
      %v252 = vunpack.c.l.b16 %v230
      %v253 = vpack.c.b16 %v246, %v245
      %v254 = vpack.c.b16 %v248, %v247
      %v255 = vpack.c.b16 %v250, %v249
      %v256 = vpack.c.b16 %v252, %v251
      %v263 = vunpack.c.l.b16 %v231
      %v264 = vunpack.c.l.b16 %v232
      %v265 = vunpack.c.l.b16 %v233
      %v266 = vunpack.c.l.b16 %v234
      %v267 = vunpack.c.l.b16 %v235
      %v268 = vunpack.c.l.b16 %v236
      %v269 = vpack.c.b16 %v264, %v263
      %v270 = vpack.c.b16 %v266, %v265
      %v271 = vpack.c.b16 %v268, %v267
      %vm275 = vcmask 392192
      %v277 = vsel %vm275, %v253, 0
      %v280 = vsel %vm275, %v254, 0
      %v283 = vsel %vm275, %v255, 0
      %v286 = vsel %vm275, %v256, 0
      %288 = vmatprep.subr.bf16.mxu0 0
      %289 = vmatpush1.bf16.msra.mxu0 %v269
      %290 = vmatprep.subr.bf16.mxu0 0
      %291 = vmatpush1.bf16.msra.mxu0 %v270
      %292 = vmatprep.subr.bf16.mxu0 0
      %293 = vmatpush1.bf16.msra.mxu0 %v271
      %294 = vmatprep.subr.bf16.mxu0 0
      %295 = vmatpush1.bf16.msra.mxu0 0
      %296 = vmatprep.subr.bf16.mxu0 0
      %297 = vmatpush1.bf16.msra.mxu0 0
      %298 = vmatprep.subr.bf16.mxu0 0
      %299 = vmatpush1.bf16.msra.mxu0 0
      %300 = vmatprep.subr.bf16.mxu0 0
      %301 = vmatpush1.bf16.msra.mxu0 0
      %302 = vmatprep.subr.bf16.mxu0 0
      %303 = vmatpush1.bf16.msra.mxu0 0
      %304 = vmatprep.subr.bf16.mxu0 0
      %305 = vmatpush1.bf16.msra.mxu0 0
      %306 = vmatprep.subr.bf16.mxu0 0
      %307 = vmatpush1.bf16.msra.mxu0 0
      %308 = vmatprep.subr.bf16.mxu0 0
      %309 = vmatpush1.bf16.msra.mxu0 0
      %310 = vmatprep.subr.bf16.mxu0 0
      %311 = vmatpush1.bf16.msra.mxu0 0
      %312 = vmatprep.subr.bf16.mxu0 0
      %313 = vmatpush1.bf16.msra.mxu0 0
      %314 = vmatprep.subr.bf16.mxu0 0
      %315 = vmatpush1.bf16.msra.mxu0 0
      %316 = vmatprep.subr.bf16.mxu0 0
      %317 = vmatpush1.bf16.msra.mxu0 0
      %318 = vmatprep.subr.bf16.mxu0 0
      %319 = vmatpush1.bf16.msra.mxu0 0
      %320 = vmatprep.mubr.bf16.mxu0 0
      %321 = vmatmul.mubr.bf16.gmra.mrb[0].mxu0 %v277
      %v322 = vpop.f32.mrb[0].mxu0
      %v323 = vadd.f32 0.0, %v322
      %v324 = vpop.f32.mrb[0].mxu0
      %v325 = vpop.f32.mrb[0].mxu0
      %v326 = vadd.f32 0.0, %v325
      %v327 = vpop.f32.mrb[0].mxu0
      %328 = vmatprep.mubr.bf16.mxu0 0
      %329 = vmatmul.mubr.bf16.gmra.mrb[0].mxu0 %v280
      %v330 = vpop.f32.mrb[0].mxu0
      %v331 = vadd.f32 0.0, %v330
      %v332 = vpop.f32.mrb[0].mxu0
      %v333 = vpop.f32.mrb[0].mxu0
      %v334 = vadd.f32 0.0, %v333
      %v335 = vpop.f32.mrb[0].mxu0
      %336 = vmatprep.mubr.bf16.mxu0 0
      %337 = vmatmul.mubr.bf16.gmra.mrb[0].mxu0 %v283
      %v338 = vpop.f32.mrb[0].mxu0
      %v339 = vadd.f32 0.0, %v338
      %v340 = vpop.f32.mrb[0].mxu0
      %v341 = vpop.f32.mrb[0].mxu0
      %v342 = vadd.f32 0.0, %v341
      %v343 = vpop.f32.mrb[0].mxu0
      %344 = vmatprep.mubr.bf16.mxu0 0
      %345 = vmatmul.mubr.bf16.gmra.mrb[0].mxu0 %v286
      %v346 = vpop.f32.mrb[0].mxu0
      %v347 = vadd.f32 0.0, %v346
      %v348 = vpop.f32.mrb[0].mxu0
      %v349 = vpop.f32.mrb[0].mxu0
      %v350 = vadd.f32 0.0, %v349
      %v351 = vpop.f32.mrb[0].mxu0
      %352 = vdwg.mxu0
      %v353 = vpack.c.bf16 %v326, %v323
      %v354 = vpack.c.bf16 %v334, %v331
      %v355 = vpack.c.bf16 %v342, %v339
      %v356 = vpack.c.bf16 %v350, %v347
      %v361 = vunpack.c.l.b16 %v353
      %v362 = vunpack.c.h.b16 %v353
      %v363 = vunpack.c.l.b16 %v354
      %v364 = vunpack.c.h.b16 %v354
      %v365 = vunpack.c.l.b16 %v355
      %v366 = vunpack.c.h.b16 %v355
      %v367 = vunpack.c.l.b16 %v356
      %v368 = vunpack.c.h.b16 %v356
      %v369 = vpack.c.b16 %v361, %v361
      %v370 = vpack.c.b16 %v362, %v362
      %v371 = vpack.c.b16 %v363, %v363
      %v372 = vpack.c.b16 %v364, %v364
      %v373 = vpack.c.b16 %v365, %v365
      %v374 = vpack.c.b16 %v366, %v366
      %v375 = vpack.c.b16 %v367, %v367
      %v376 = vpack.c.b16 %v368, %v368
      %385 = vst [vmem:[%s212] sm:$0xf] %v369
      %386 = vst [vmem:[%s212 + $0x4] sm:$0xf] %v370
      %387 = vst [vmem:[%s212 + $0x8] sm:$0xf] %v371
      %388 = vst [vmem:[%s212 + $0xc] sm:$0xf] %v372
      %389 = vst [vmem:[%s212 + $0x10] sm:$0xf] %v373
      %390 = vst [vmem:[%s212 + $0x14] sm:$0xf] %v374
      %391 = vst [vmem:[%s212 + $0x18] sm:$0xf] %v375
      %392 = vst [vmem:[%s212 + $0x1c] sm:$0xf] %v376
      %v393 = vadd.f32 %v323, %v326
      %v394 = vadd.f32 %v393, %v331
      %v395 = vadd.f32 %v394, %v334
      %v396 = vadd.f32 %v395, %v339
      %v397 = vadd.f32 %v396, %v342
      %v398 = vadd.f32 %v397, %v347
      %v399 = vadd.f32 %v398, %v350
      %400 = vst [vmem:[%s217] sm:$0xff] %v399
      %v401 = vmul.f32 %v323, %v323
      %v402 = vmul.f32 %v326, %v326
      %v403 = vmul.f32 %v331, %v331
      %v404 = vmul.f32 %v334, %v334
      %v405 = vmul.f32 %v339, %v339
      %v406 = vmul.f32 %v342, %v342
      %v407 = vmul.f32 %v347, %v347
      %v408 = vmul.f32 %v350, %v350
      %v409 = vadd.f32 %v401, %v402
      %v410 = vadd.f32 %v409, %v403
      %v411 = vadd.f32 %v410, %v404
      %v412 = vadd.f32 %v411, %v405
      %v413 = vadd.f32 %v412, %v406
      %v414 = vadd.f32 %v413, %v407
      %v415 = vadd.f32 %v414, %v408
      %416 = vst [vmem:[%s221] sm:$0xff] %v415
      %s417 = smul.u32 8, %s16
      %p418 = scmp.lt.s32.totalorder %s417, 15
      %s419 = scalar_select %p418, %s417, 15
      %s420 = smul.addr %s419, 4
      %s421 = scalar_lea.vmem %s2, %s420
      %p422 = scmp.lt.s32.totalorder %s16, 1
      %s423 = scalar_select %p422, %s16, 1
      %s424 = smul.addr %s423, 8
      %s425 = scalar_lea.vmem %s3, %s424
      %p426 = scmp.lt.s32.totalorder %s16, 1
      %s427 = scalar_select %p426, %s16, 1
      %s428 = smul.addr %s427, 8
      %s429 = scalar_lea.vmem %s4, %s428
      // Predicated region
      $region29: #{_down_forward_impl.1} parent=27 // pred_check
        %p430 = pneg %p81
      $region30: #{_down_forward_impl.1} parent=27 // pred_check_branch
        %432 = sbr.rel (%p430) target = $region32
      $region31: #{_down_forward_impl.1} parent=27 // pred_region
        %s433 = smul.u32 8, %s16
      $region32: #{_down_forward_impl.1} parent=27 // pred_fallthru
        _
      // Predicated region
      $region33: #{_down_forward_impl.1} parent=27 // pred_check
        %p434 = pneg %p107
      $region34: #{_down_forward_impl.1} parent=27 // pred_check_branch
        %436 = sbr.rel (%p434) target = $region36
      $region35: #{_down_forward_impl.1} parent=27 // pred_region
        _
      $region36: #{_down_forward_impl.1} parent=27 // pred_fallthru
        _
      // Predicated region
      $region37: #{_down_forward_impl.1} parent=27 // pred_check
        %p437 = pneg %p133
      $region38: #{_down_forward_impl.1} parent=27 // pred_check_branch
        %439 = sbr.rel (%p437) target = $region40
      $region39: #{_down_forward_impl.1} parent=27 // pred_region
        _
      $region40: #{_down_forward_impl.1} parent=27 // pred_fallthru
        _
    $region28: #{_down_forward_impl.1} parent=5 // pred_fallthru
      _
    %p440 = scmp.le.s32.totalorder 2, %s11
    // Predicated region
    $region41: #{_down_forward_impl.1} parent=5 // pred_check
      %p441 = pneg %p440
    $region42: #{_down_forward_impl.1} parent=5 // pred_check_branch
      %443 = sbr.rel (%p441) target = $region44
    $region43: #{_down_forward_impl.1} parent=5 // pred_region
      %s444 = ssub.s32 %s11, 2
      // Predicated region
      $region45: #{_down_forward_impl.1} parent=43 // pred_check
        %p445 = pneg %p87
      $region46: #{_down_forward_impl.1} parent=43 // pred_check_branch
        %447 = sbr.rel (%p445) target = $region48
      $region47: #{_down_forward_impl.1} parent=43 // pred_region
        %s448 = smul.u32 8, %s17
        %p449 = scmp.lt.s32.totalorder %s448, 15
        %s450 = scalar_select %p449, %s448, 15
        %s451 = smul.addr %s450, 4
        %s452 = scalar_lea.vmem %s2, %s451
      $region48: #{_down_forward_impl.1} parent=43 // pred_fallthru
        _
      // Predicated region
      $region49: #{_down_forward_impl.1} parent=43 // pred_check
        %p453 = pneg %p113
      $region50: #{_down_forward_impl.1} parent=43 // pred_check_branch
        %455 = sbr.rel (%p453) target = $region52
      $region51: #{_down_forward_impl.1} parent=43 // pred_region
        %p456 = scmp.lt.s32.totalorder %s17, 1
        %s457 = scalar_select %p456, %s17, 1
        %s458 = smul.addr %s457, 8
        %s459 = scalar_lea.vmem %s3, %s458
      $region52: #{_down_forward_impl.1} parent=43 // pred_fallthru
        _
      // Predicated region
      $region53: #{_down_forward_impl.1} parent=43 // pred_check
        %p460 = pneg %p139
      $region54: #{_down_forward_impl.1} parent=43 // pred_check_branch
        %462 = sbr.rel (%p460) target = $region56
      $region55: #{_down_forward_impl.1} parent=43 // pred_region
        %p463 = scmp.lt.s32.totalorder %s17, 1
        %s464 = scalar_select %p463, %s17, 1
        %s465 = smul.addr %s464, 8
        %s466 = scalar_lea.vmem %s4, %s465
      $region56: #{_down_forward_impl.1} parent=43 // pred_fallthru
        _
    $region44: #{_down_forward_impl.1} parent=5 // pred_fallthru
      _
  $region6: #{_down_forward_impl.1} parent=0 // loop_footer
    %s15 = sadd.s32 1, %s11
  $region7: #{_down_forward_impl.1} parent=0 // loop_footer_branch
    %10 = sbr.rel target = $region3
  $region8: #{_down_forward_impl.1} parent=0 // loop_exit
    _

</llo_original>
